<compile_context>
chip_gen: v6e
topology: v6e:2x2x1
jax: 0.10.0
libtpu: 0.0.40
codegen_flags: <defaults>
</compile_context>

<pallas_src>
import functools
import math

import jax
import jax.numpy as jnp
from jax.experimental import pallas as pl
from jax.experimental.pallas import tpu as pltpu


_LOG_1E4 = math.log(1e-4)    # log of the one-hot clamp floor


def _round_up(x, m):
    return ((x + m - 1) // m) * m


def _sce_kernel(pred_ref, labels_ref, out_ref, *, alpha, beta, n_total, tile_n):
    pi = pl.program_id(0)    # tile index along the batch (lane) axis -- reduction

    # Zero the resident accumulator block at the start of the reduction sweep.
    @pl.when(pi == 0)
    def _():
        out_ref[...] = jnp.zeros_like(out_ref)

    logits = pred_ref[...].astype(jnp.float32)      # (C, tile_n); cast after DMA lands
    labels = labels_ref[...]                         # (1, tile_n) int32
    num_classes, tn = logits.shape

    # Columns (samples) past the true batch size are masked only on the final per-sample
    # scalars via selects; class-axis reductions never mix lanes, so padded-lane garbage
    # (even Inf/NaN) cannot leak into valid lanes.
    col0 = pi * tile_n
    col_ids = col0 + jax.lax.broadcasted_iota(jnp.int32, (1, tn), 1)
    valid = col_ids < n_total                        # (1, tile_n) bool

    # One-hot via sublane-iota compare (classes live on the sublane axis).
    class_ids = jax.lax.broadcasted_iota(jnp.int32, (num_classes, tn), 0)
    onehot = class_ids == labels                     # (C, tile_n) bool

    # ---- single-exp softmax pass (per sample == per lane column) ----
    col_max = jnp.max(logits, axis=0, keepdims=True)     # (1, tile_n)
    shifted = logits - col_max
    e = jnp.exp(shifted)                                  # only (C, tile_n) transcendental
    col_sum = jnp.sum(e, axis=0, keepdims=True)           # (1, tile_n)
    lse = jnp.log(col_sum)

    # ---- CE: lse - shifted[label]  (no full log_softmax materialized) ----
    label_shifted = jnp.sum(jnp.where(onehot, shifted, 0.0), axis=0, keepdims=True)
    ce_per = lse - label_shifted                          # (1, tile_n)

    # ---- RCE: -log(1e-4) * (sum(p) - p[label]),  p = max(softmax, 1e-7) ----
    # (upper clamp of softmax to 1.0 is a no-op, dropped)
    inv = pl.reciprocal(col_sum, approx=False)            # exact; only (1, tile_n) wide
    p = jnp.maximum(e * inv, 1e-7)                        # (C, tile_n)
    p_sum = jnp.sum(p, axis=0, keepdims=True)
    p_label = jnp.maximum(jnp.exp(label_shifted) * inv, 1e-7)   # (1, tile_n), EUP slot
    rce_per = (-_LOG_1E4) * (p_sum - p_label)

    tile_ce = jnp.sum(jnp.where(valid, ce_per, 0.0))      # sums; /N happens once, outside
    tile_rce = jnp.sum(jnp.where(valid, rce_per, 0.0))

    # Accumulate into the resident output block (scalar broadcast; trivial cost).
    out_ref[...] = out_ref[...] + (alpha * tile_ce + beta * tile_rce)


def sce_loss(pred, labels, *, alpha, beta, num_classes, max_tile_n=None):
    """pred: (N, C) float (f32/bf16), labels: (N,) int. Returns scalar f32 loss."""
    n, c = pred.shape
    assert c == num_classes

    # Lane-dense layout: batch on lanes, classes on sublanes.  The transpose is one XLA
    # pass over (small) data; the kernel then reads dense tiles with no C->128 padding.
    pred_t = jnp.transpose(pred)                        # (C, N)
    labels_row = labels.reshape(1, n).astype(jnp.int32)  # (1, N), lane-dense

    itemsize = jnp.dtype(pred.dtype).itemsize
    sub_in = {4: 8, 2: 16, 1: 32}.get(itemsize, 8)
    c_sub_in = _round_up(c, sub_in)                     # sublane-padded class rows (input dtype)
    c_sub_f32 = _round_up(c, 8)                         # f32 temporaries

    # Generation-aware VMEM budget (v5e/v6e: 128 MiB, v7x: 64 MiB per TensorCore).
    try:
        vmem_cap = int(pltpu.get_tpu_info().vmem_capacity_bytes)
    except Exception:
        vmem_cap = 64 * 1024 * 1024
    block_budget = vmem_cap // 2                        # 64 MiB on 128-MiB parts, 32 MiB on v7x
    vmem_limit = (vmem_cap * 3) // 4                    # 96 MiB / 48 MiB

    # Bytes per lane column: 2x double-buffered inputs (pred tile + int32 labels row,
    # both sublane-padded) plus ~6 live (C_pad, tile_n) f32 temporaries.
    per_lane = 2 * (c_sub_in * itemsize + 8 * 4) + 6 * c_sub_f32 * 4
    derived = max((block_budget // per_lane) // 128 * 128, 128)
    if max_tile_n is not None:                          # test hook to force multi-tile grids
        derived = min(derived, max(128, (max_tile_n // 128) * 128))

    if n <= derived:
        tile_n = n                                      # single tile: full lane extent allowed
    else:
        tile_n = derived                                # multiple of 128; last tile masked
    num_tiles = (n + tile_n - 1) // tile_n

    kernel = functools.partial(
        _sce_kernel, alpha=float(alpha), beta=float(beta), n_total=n, tile_n=tile_n)

    acc = pl.pallas_call(
        kernel,
        out_shape=jax.ShapeDtypeStruct((8, 128), jnp.float32),
        grid=(num_tiles,),
        in_specs=[
            pl.BlockSpec((c, tile_n), lambda i: (0, i)),     # pred (C, N): dense lane DMA
            pl.BlockSpec((1, tile_n), lambda i: (0, i)),     # labels (1, N): lane-dense
        ],
        out_specs=pl.BlockSpec((8, 128), lambda i: (0, 0)),  # resident accumulator block
        compiler_params=pltpu.CompilerParams(
            dimension_semantics=("arbitrary",),              # reduction axis
            vmem_limit_bytes=int(vmem_limit),
        ),
    )(pred_t, labels_row)

    # Single division by the true batch size.
    return acc[0, 0] / n


def _sce_loss_ref(pred, labels, *, alpha, beta, num_classes):
    """Pure-JAX reference, mirrors the PyTorch forward exactly."""
    pred = pred.astype(jnp.float32)
    log_sm = jax.nn.log_softmax(pred, axis=1)
    onehot = jax.nn.one_hot(labels, num_classes, dtype=jnp.float32)
    ce = jnp.mean(-jnp.sum(onehot * log_sm, axis=1))
    p = jnp.clip(jax.nn.softmax(pred, axis=1), 1e-7, 1.0)
    oh_clamped = jnp.clip(onehot, 1e-4, 1.0)
    rce = -jnp.sum(p * jnp.log(oh_clamped), axis=1)
    return alpha * ce + beta * jnp.mean(rce)


if __name__ == "__main__":
    key = jax.random.PRNGKey(0)
    k1, k2, k3, k4 = jax.random.split(key, 4)

    alpha, beta = 0.5, 1.0

    # Case 1: module default num_classes=2, small batch (single tile, full lane extent).
    N, C = 8, 2
    pred = jax.random.normal(k1, (N, C), dtype=jnp.float32)
    labels = jax.random.randint(k2, (N,), 0, C, dtype=jnp.int32)
    loss = jax.block_until_ready(
        sce_loss(pred, labels, alpha=alpha, beta=beta, num_classes=C))
    ref = _sce_loss_ref(pred, labels, alpha=alpha, beta=beta, num_classes=C)
    assert jnp.allclose(loss, ref, rtol=1e-5, atol=1e-5), (loss, ref)

    # Case 2: ragged multi-tile batch (forces 3 lane tiles with a masked tail).
    N2, C2 = 300, 6
    pred2 = jax.random.normal(k3, (N2, C2), dtype=jnp.float32)
    labels2 = jax.random.randint(k4, (N2,), 0, C2, dtype=jnp.int32)
    loss2 = jax.block_until_ready(
        sce_loss(pred2, labels2, alpha=alpha, beta=beta, num_classes=C2, max_tile_n=128))
    ref2 = _sce_loss_ref(pred2, labels2, alpha=alpha, beta=beta, num_classes=C2)
    assert jnp.allclose(loss2, ref2, rtol=1e-5, atol=1e-5), (loss2, ref2)

    print("KERNEL_OK")
</pallas_src>

<mosaic_0001>
module attributes {stable_mosaic.version = 11 : i64} {
  func.func @_sce_kernel(%arg0: i32, %arg1: memref<2x8xf32, #tpu.memory_space<vmem>>, %arg2: memref<1x8xi32, #tpu.memory_space<vmem>>, %arg3: memref<8x128xf32, #tpu.memory_space<vmem>>) attributes {dimension_semantics = [#tpu.dimension_semantics<arbitrary>], iteration_bounds = array<i64: 1>, scalar_prefetch = 0 : i64, scratch_operands = 0 : i64, tpu.core_type = #tpu.core_type<tc>, window_params = [{transform_indices = @transform_0, window_bounds = array<i64: 2, 8>}, {transform_indices = @transform_1, window_bounds = array<i64: 1, 8>}, {pipeline_mode = #tpu.pipeline_mode<synchronous>, transform_indices = @transform_2, window_bounds = array<i64: 8, 128>}]} {
    %c0_i32 = arith.constant 0 : i32
    %0 = arith.cmpi eq, %arg0, %c0_i32 : i32
    %1 = arith.extui %0 : i1 to i32
    %c0_i32_0 = arith.constant 0 : i32
    %2 = arith.cmpi ne, %1, %c0_i32_0 : i32
    scf.if %2 {
      %cst_22 = arith.constant 0.000000e+00 : f32
      %60 = vector.broadcast %cst_22 : f32 to vector<8x128xf32>
      %c0_23 = arith.constant 0 : index
      %c0_24 = arith.constant 0 : index
      %61 = vector.load %arg3[%c0_23, %c0_24] : memref<8x128xf32, #tpu.memory_space<vmem>>, vector<8x128xf32>
      tpu.vector_store %arg3[%c0_23, %c0_24], %60 {strides = array<i32>} : memref<8x128xf32, #tpu.memory_space<vmem>>, vector<8x128xf32>,
    } else {
    }
    %c0 = arith.constant 0 : index
    %c0_1 = arith.constant 0 : index
    %3 = vector.load %arg1[%c0, %c0_1] : memref<2x8xf32, #tpu.memory_space<vmem>>, vector<2x8xf32>
    %c0_2 = arith.constant 0 : index
    %c0_3 = arith.constant 0 : index
    %4 = vector.load %arg2[%c0_2, %c0_3] : memref<1x8xi32, #tpu.memory_space<vmem>>, vector<1x8xi32>
    %c8_i32 = arith.constant 8 : i32
    %5 = arith.muli %arg0, %c8_i32 : i32
    %6 = tpu.iota {dimensions = array<i32: 1>} : vector<1x8xi32>
    %7 = vector.broadcast %5 : i32 to vector<1x8xi32>
    %8 = arith.addi %7, %6 : vector<1x8xi32>
    %c8_i32_4 = arith.constant 8 : i32
    %9 = vector.broadcast %c8_i32_4 : i32 to vector<1x8xi32>
    %10 = arith.cmpi slt, %8, %9 : vector<1x8xi32>
    %11 = tpu.iota {dimensions = array<i32: 0>} : vector<2x8xi32>
    %12 = vector.broadcast %4 : vector<1x8xi32> to vector<2x8xi32>
    %13 = arith.cmpi eq, %11, %12 : vector<2x8xi32>
    %cst = arith.constant dense<0xFF800000> : vector<8xf32>
    %14 = vector.multi_reduction <maximumf>, %3, %cst [0] : vector<2x8xf32> to vector<8xf32>
    %15 = vector.shape_cast %14 : vector<8xf32> to vector<1x8xf32>
    %16 = vector.broadcast %15 : vector<1x8xf32> to vector<2x8xf32>
    %17 = arith.subf %3, %16 : vector<2x8xf32>
    %18 = math.exp %17 : vector<2x8xf32>
    %cst_5 = arith.constant dense<0.000000e+00> : vector<8xf32>
    %19 = vector.multi_reduction <add>, %18, %cst_5 [0] : vector<2x8xf32> to vector<8xf32>
    %20 = vector.shape_cast %19 : vector<8xf32> to vector<1x8xf32>
    %21 = math.log %20 : vector<1x8xf32>
    %cst_6 = arith.constant 0.000000e+00 : f32
    %22 = vector.broadcast %cst_6 : f32 to vector<2x8xf32>
    %23 = arith.select %13, %17, %22 : vector<2x8xi1>, vector<2x8xf32>
    %cst_7 = arith.constant dense<0.000000e+00> : vector<8xf32>
    %24 = vector.multi_reduction <add>, %23, %cst_7 [0] : vector<2x8xf32> to vector<8xf32>
    %25 = vector.shape_cast %24 : vector<8xf32> to vector<1x8xf32>
    %26 = arith.subf %21, %25 : vector<1x8xf32>
    %27 = tpu.reciprocal %20 : vector<1x8xf32> -> vector<1x8xf32>
    %28 = vector.broadcast %27 : vector<1x8xf32> to vector<2x8xf32>
    %29 = arith.mulf %18, %28 : vector<2x8xf32>
    %cst_8 = arith.constant 1.000000e-07 : f32
    %30 = vector.broadcast %cst_8 : f32 to vector<2x8xf32>
    %31 = arith.maximumf %29, %30 : vector<2x8xf32>
    %cst_9 = arith.constant dense<0.000000e+00> : vector<8xf32>
    %32 = vector.multi_reduction <add>, %31, %cst_9 [0] : vector<2x8xf32> to vector<8xf32>
    %33 = vector.shape_cast %32 : vector<8xf32> to vector<1x8xf32>
    %34 = math.exp %25 : vector<1x8xf32>
    %35 = arith.mulf %34, %27 : vector<1x8xf32>
    %cst_10 = arith.constant 1.000000e-07 : f32
    %36 = vector.broadcast %cst_10 : f32 to vector<1x8xf32>
    %37 = arith.maximumf %35, %36 : vector<1x8xf32>
    %38 = arith.subf %33, %37 : vector<1x8xf32>
    %cst_11 = arith.constant 9.21034049 : f32
    %39 = vector.broadcast %cst_11 : f32 to vector<1x8xf32>
    %40 = arith.mulf %39, %38 : vector<1x8xf32>
    %cst_12 = arith.constant 0.000000e+00 : f32
    %41 = vector.broadcast %cst_12 : f32 to vector<1x8xf32>
    %42 = arith.select %10, %26, %41 : vector<1x8xi1>, vector<1x8xf32>
    %43 = vector.shape_cast %42 : vector<1x8xf32> to vector<1x1x8xf32>
    %cst_13 = arith.constant dense<0.000000e+00> : vector<1xf32>
    %44 = vector.multi_reduction <add>, %43, %cst_13 [1, 2] : vector<1x1x8xf32> to vector<1xf32>
    %45 = vector.shape_cast %44 : vector<1xf32> to vector<1x1x1xf32>
    %46 = vector.extract %45[0, 0, 0] : f32 from vector<1x1x1xf32>
    %cst_14 = arith.constant 0.000000e+00 : f32
    %47 = vector.broadcast %cst_14 : f32 to vector<1x8xf32>
    %48 = arith.select %10, %40, %47 : vector<1x8xi1>, vector<1x8xf32>
    %49 = vector.shape_cast %48 : vector<1x8xf32> to vector<1x1x8xf32>
    %cst_15 = arith.constant dense<0.000000e+00> : vector<1xf32>
    %50 = vector.multi_reduction <add>, %49, %cst_15 [1, 2] : vector<1x1x8xf32> to vector<1xf32>
    %51 = vector.shape_cast %50 : vector<1xf32> to vector<1x1x1xf32>
    %52 = vector.extract %51[0, 0, 0] : f32 from vector<1x1x1xf32>
    %c0_16 = arith.constant 0 : index
    %c0_17 = arith.constant 0 : index
    %53 = vector.load %arg3[%c0_16, %c0_17] : memref<8x128xf32, #tpu.memory_space<vmem>>, vector<8x128xf32>
    %cst_18 = arith.constant 5.000000e-01 : f32
    %54 = arith.mulf %cst_18, %46 : f32
    %cst_19 = arith.constant 1.000000e+00 : f32
    %55 = arith.mulf %cst_19, %52 : f32
    %56 = arith.addf %54, %55 : f32
    %57 = vector.broadcast %56 : f32 to vector<8x128xf32>
    %58 = arith.addf %53, %57 : vector<8x128xf32>
    %c0_20 = arith.constant 0 : index
    %c0_21 = arith.constant 0 : index
    %59 = vector.load %arg3[%c0_20, %c0_21] : memref<8x128xf32, #tpu.memory_space<vmem>>, vector<8x128xf32>
    tpu.vector_store %arg3[%c0_20, %c0_21], %58 {strides = array<i32>} : memref<8x128xf32, #tpu.memory_space<vmem>>, vector<8x128xf32>,
    return
  }
  func.func @transform_0(%arg0: i32) -> (i32, i32) {
    %c0_i32 = arith.constant 0 : i32
    %c0_i32_0 = arith.constant 0 : i32
    return %c0_i32, %arg0 : i32, i32
  }
  func.func @transform_1(%arg0: i32) -> (i32, i32) {
    %c0_i32 = arith.constant 0 : i32
    %c0_i32_0 = arith.constant 0 : i32
    return %c0_i32, %arg0 : i32, i32
  }
  func.func @transform_2(%arg0: i32) -> (i32, i32) {
    %c0_i32 = arith.constant 0 : i32
    %c0_i32_0 = arith.constant 0 : i32
    %c0_i32_1 = arith.constant 0 : i32
    return %c0_i32, %c0_i32_0 : i32, i32
  }
}

</mosaic_0001>

<llo_original>
// kernel: tpu_custom_call.1
$region0: #{tpu_custom_call.1}
  #allocation0 [shape = 'u32[]', space=smem, size = 0x4, offset = 0x4, fixed_abs, tag = 'smem constant byte address 0x4 - core index']
  #allocation1 [shape = 'u32[144,128]{1,0:T(1,128)}', space=vmem, size = 0x12000, scoped, tag = 'internal scratch']
  %s0 = inlined_call_operand.hbm [shape: f32[2,8], index: 0, kind: input, shape index: {}]
  %s1 = inlined_call_operand.vmem [shape: s32[1,8], index: 1, kind: input, shape index: {}]
  %s2 = inlined_call_operand.hbm [shape: f32[8,128], index: 2, kind: output, shape index: {}]
  %s3 = sld [smem:[#allocation0]]
  $region26: #{tpu_custom_call.1} parent=0
    _
  %s5 = ssub.s32 1, %s3
  %s6 = scalar_select 0, %s5, %s3
  $region1: #{tpu_custom_call.1} parent=0
    #allocation2 [shape = 'u8[1024]{0}', space=vmem, size = 0x400, scoped, tag = 'input window, operand 0, single buffered']
    #allocation3 [shape = 's32[1]{0}', space=sflag, size = 0x4, scoped, tag = 'scoped memory for tpu_custom_call.1']
    #allocation4 [shape = 's32[1]{0}', space=sflag, size = 0x4, scoped, tag = 'scoped memory for tpu_custom_call.1']
    #allocation5 [shape = 'u8[4096]{0}', space=vmem, size = 0x1000, scoped, tag = 'output window, operand 0, single buffered']
    %7 = vsyncpa [#allocation3], 0
    %8 = vsyncpa [#allocation4], 0
    // Predicated region
    $region2: #{tpu_custom_call.1} parent=1 // pred_check
      _
    $region3: #{tpu_custom_call.1} parent=1 // pred_check_branch
      %10 = sbr.rel (0) target = $region5
    $region4: #{tpu_custom_call.1} parent=1 // pred_region
      %s12 = ssub.s32 32, 32
      %13 = vsyncadd [#allocation3], %s12
      %s15 = sshll.u32 [#allocation2], 4
      %s16 = int_to_ptr.vmem [resolvable:$true] %s15
      %18 = dma.hbm_to_vmem [thread:$0]  %s0, 32, %s16, [#allocation3]
    $region5: #{tpu_custom_call.1} parent=1 // pred_fallthru
      _
    // Predicated region
    $region6: #{tpu_custom_call.1} parent=1 // pred_check
      _
    $region7: #{tpu_custom_call.1} parent=1 // pred_check_branch
      %20 = sbr.rel (0) target = $region9
    $region8: #{tpu_custom_call.1} parent=1 // pred_region
      _
    $region9: #{tpu_custom_call.1} parent=1 // pred_fallthru
      _
    // Predicated region
    $region10: #{tpu_custom_call.1} parent=1 // pred_check
      _
    $region11: #{tpu_custom_call.1} parent=1 // pred_check_branch
      %22 = sbr.rel (0) target = $region13
    $region12: #{tpu_custom_call.1} parent=1 // pred_region
      %23 = dma.done [#allocation3], 32
    $region13: #{tpu_custom_call.1} parent=1 // pred_fallthru
      _
    %p24 = scmp.eq.s32.totalorder 0, 0
    // Predicated region
    $region14: #{tpu_custom_call.1} parent=1 // pred_check
      %p25 = pneg %p24
    $region15: #{tpu_custom_call.1} parent=1 // pred_check_branch
      %27 = sbr.rel (%p25) target = $region17
    $region16: #{tpu_custom_call.1} parent=1 // pred_region
      %28 = vst [vmem:[#allocation5] sm:$0xff] 0.0
    $region17: #{tpu_custom_call.1} parent=1 // pred_fallthru
      _
    %v29 = vld [vmem:[#allocation2] sm:$0x3]
    %v30 = vld [vmem:[%s1] sm:$0x1]
    %s31 = smul.u32 0, 8
    %v32 = vlaneseq
    %v33 = vand.u32 %v32, 127
    %v34 = vstv %s31
    %v35 = vadd.s32 %v34, %v33
    %vm36 = vcmp.lt.s32.totalorder %v35, 8
    %v37 = vlaneseq
    %v38 = vshrl.u32 %v37, 7
    %v39 = vlaneseq
    %v40 = vshrl.u32 %v39, 7
    %v41 = vsub.s32 0, %v40
    %v42 = vrot.slane %v30, %v41
    %vm43 = vcmp.eq.s32.totalorder %v38, %v42
    %vm44 = vcmask 58368
    %v45 = vsel %vm44, %v29, -inf
    %v46 = vrot.slane %v45, 4
    %v47 = vmax.f32 %v45, %v46
    %v48 = vrot.slane %v47, 2
    %v49 = vmax.f32 %v47, %v48
    %v50 = vrot.slane %v49, 1
    %v51 = vmax.f32 %v49, %v50
    %v52 = vsub.f32 %v29, %v51
    %v53 = vmul.f32 %v52, 1.442695
    %v54 = vpow.pop %v53
    %v55 = vsel %vm44, %v54, 0.0
    %v56 = vrot.slane %v55, 4
    %v57 = vadd.f32 %v55, %v56
    %v58 = vrot.slane %v57, 2
    %v59 = vadd.f32 %v57, %v58
    %v60 = vrot.slane %v59, 1
    %v61 = vadd.f32 %v59, %v60
    %v62 = vlog2.pop %v61
    %v63 = vmul.f32 %v62, 0.6931472
    %v64 = vsel %vm43, %v52, 0.0
    %v65 = vsel %vm44, %v64, 0.0
    %v66 = vrot.slane %v65, 4
    %v67 = vadd.f32 %v65, %v66
    %v68 = vrot.slane %v67, 2
    %v69 = vadd.f32 %v67, %v68
    %v70 = vrot.slane %v69, 1
    %v71 = vadd.f32 %v69, %v70
    %v72 = vsub.f32 %v63, %v71
    %v73 = vrcp.pop %v61
    %v74 = vmul.f32 %v54, %v73
    %v75 = vmax.f32 %v74, 1e-07
    %v76 = vsel %vm44, %v75, 0.0
    %v77 = vrot.slane %v76, 4
    %v78 = vadd.f32 %v76, %v77
    %v79 = vrot.slane %v78, 2
    %v80 = vadd.f32 %v78, %v79
    %v81 = vrot.slane %v80, 1
    %v82 = vadd.f32 %v80, %v81
    %v83 = vmul.f32 %v71, 1.442695
    %v84 = vpow.pop %v83
    %v85 = vmul.f32 %v84, %v73
    %v86 = vmax.f32 %v85, 1e-07
    %v87 = vsub.f32 %v82, %v86
    %v88 = vmul.f32 %v87, 9.2103405
    %v89 = vsel %vm36, %v72, 0.0
    %vm90 = vcmask 57344
    %v91 = vsel %vm90, %v89, 0.0
    %92 = vadd.xlane.f32.xlu0 %v91
    %v93 = vpop.xlane.xlu0 %92
    %v94 = vrot.slane %v93, 4
    %v95 = vadd.f32 %v93, %v94
    %v96 = vrot.slane %v95, 2
    %v97 = vadd.f32 %v95, %v96
    %v98 = vrot.slane %v97, 1
    %v99 = vadd.f32 %v97, %v98
    %s100 = vtos %v99
    %v101 = vsel %vm36, %v88, 0.0
    %v102 = vsel %vm90, %v101, 0.0
    %103 = vadd.xlane.f32.xlu0 %v102
    %v104 = vpop.xlane.xlu0 %103
    %v105 = vrot.slane %v104, 4
    %v106 = vadd.f32 %v104, %v105
    %v107 = vrot.slane %v106, 2
    %v108 = vadd.f32 %v106, %v107
    %v109 = vrot.slane %v108, 1
    %v110 = vadd.f32 %v108, %v109
    %s111 = vtos %v110
    %v112 = vld [vmem:[#allocation5] sm:$0xff]
    %s113 = smul.f32 %s100, 0.5
    %s114 = sadd.f32 %s113, %s111
    %v115 = vstv %s114
    %v116 = vadd.f32 %v112, %v115
    %117 = vst [vmem:[#allocation5] sm:$0xff] %v116
    // Predicated region
    $region18: #{tpu_custom_call.1} parent=1 // pred_check
      _
    $region19: #{tpu_custom_call.1} parent=1 // pred_check_branch
      %119 = sbr.rel (0) target = $region21
    $region20: #{tpu_custom_call.1} parent=1 // pred_region
      %s121 = ssub.s32 128, 128
      %122 = vsyncadd [#allocation4], %s121
      %s124 = sshll.u32 [#allocation5], 4
      %s125 = int_to_ptr.vmem [resolvable:$true] %s124
      %127 = dma.vmem_to_hbm [thread:$0]  %s125, 128, %s2, [#allocation4]
    $region21: #{tpu_custom_call.1} parent=1 // pred_fallthru
      _
    // Predicated region
    $region22: #{tpu_custom_call.1} parent=1 // pred_check
      _
    $region23: #{tpu_custom_call.1} parent=1 // pred_check_branch
      %129 = sbr.rel (0) target = $region25
    $region24: #{tpu_custom_call.1} parent=1 // pred_region
      %130 = dma.done [#allocation4], 128
    $region25: #{tpu_custom_call.1} parent=1 // pred_fallthru
      _
    %131 = vsyncpa [#allocation3], 1
    %132 = vsyncpa [#allocation4], 1

</llo_original>
